<compile_context>
chip_gen: v6e
topology: v6e:2x2x1
jax: 0.10.0
libtpu: 0.0.40
codegen_flags: <defaults>
</compile_context>

<pallas_src>
import functools

import jax
import jax.numpy as jnp
from jax.experimental import pallas as pl
from jax.experimental.pallas import tpu as pltpu


# ---------------------------------------------------------------------------
# Hardware-aware sizing helpers
# ---------------------------------------------------------------------------

def _vmem_capacity_bytes():
    try:
        return int(pltpu.get_tpu_info().vmem_capacity_bytes)
    except Exception:            # off-TPU tracing / older runtimes
        return 64 << 20          # v7x-sized conservative default


def _block_budget_bytes():
    # Budget for the double-buffered working set: ~1/3 of physical VMEM,
    # i.e. ~42 MiB on v5e/v6e (128 MiB) and ~21 MiB on v7x (64 MiB).
    cap = _vmem_capacity_bytes()
    return int(min(48 << 20, max(16 << 20, cap // 3)))


def _vmem_limit_bytes():
    # Generous scoped limit, but always leaving headroom for compiler scratch:
    # 112 MiB on 128 MiB parts, 56 MiB on v7x.
    cap = _vmem_capacity_bytes()
    return int(max(32 << 20, min(cap * 7 // 8, cap - (8 << 20))))


def _choose_row_tile(n, h, w, cin, cout, ccorr, in_bytes, corr_bytes, out_bytes):
    """Row tile Th for the fused kernel.

    Th divides H, Th % 8 == 0 (or Th == H), (Th*W) % 128 == 0 (or Th == H, i.e.
    full-extent blocks), and the double-buffered blocks fit the VMEM budget.
    """
    c4 = 4 * cout
    budget = _block_budget_bytes()
    weight_bytes = c4 * cin * in_bytes + 4 * c4
    per_row = 2 * (cin * w * in_bytes
                   + 4 * w * (ccorr * corr_bytes + (ccorr + cout) * out_bytes))
    cap_rows = max(1, (budget - weight_bytes) // max(per_row, 1))

    cands = [d for d in range(8, h, 8) if h % d == 0 and (d * w) % 128 == 0]
    cands.append(h)                                  # full-extent block is always legal
    if n == 1:                                       # keep >=2 parallel steps (v7x: 2 TCs)
        multi = [d for d in cands if h // d >= 2]
        if multi:
            cands = multi
    fit = [d for d in cands if d <= cap_rows]
    return max(fit) if fit else min(cands)


def _choose_flat_tile(hw, cin, c4, in_bytes, out_bytes):
    """H*W tile for the fallback kernel: lane-dense (multiple of 128) divisor of
    H*W that fits the budget, else the smallest legal candidate."""
    budget = _block_budget_bytes()
    weight_bytes = c4 * cin * in_bytes + 4 * c4
    per_col = 2 * (cin * in_bytes + c4 * out_bytes)
    cap = max(128, (budget - weight_bytes) // max(per_col, 1))
    cands = [t for t in range(128, hw + 1, 128) if hw % t == 0] or [hw]
    fit = [t for t in cands if t <= cap]
    return max(fit) if fit else min(cands)


# ---------------------------------------------------------------------------
# Kernels
# ---------------------------------------------------------------------------

def _fused_deconv_kernel(x_ref, w_ref, b_ref, corr_ref, o_ref):
    """relu(W @ x + b) -> stride-2 pixel shuffle -> concat(corr, .), all in VMEM.

    x_ref:    (1, Cin, Th*W)        Th input rows, spatially flattened
    w_ref:    (4*Cout, Cin)         rows ordered (kh, kw, Cout)
    b_ref:    (4*Cout, 1)           f32
    corr_ref: (1, Ccorr, 2*Th, 2*W) skip connection tile
    o_ref:    (1, Ccorr+Cout, 2*Th, 2*W)
    """
    ccorr = corr_ref.shape[1]
    two_th, two_w = o_ref.shape[2], o_ref.shape[3]
    th, w = two_th // 2, two_w // 2
    cout = w_ref.shape[0] // 4

    y = jnp.dot(w_ref[...], x_ref[0], preferred_element_type=jnp.float32)
    y = jnp.maximum(y + b_ref[...], 0.0)              # (4*Cout, Th*W), f32
    y = y.reshape(4, cout, th, w)                     # [kh*2+kw, c, t, w]

    # out[c, 2t+kh, 2w+kw] = y[kh*2+kw, c, t, w]  -- VMEM/XLU relayouts only,
    # no extra HBM round trip for the shuffle.
    row0 = jnp.stack([y[0], y[1]], axis=-1).reshape(cout, th, two_w)   # kh = 0
    row1 = jnp.stack([y[2], y[3]], axis=-1).reshape(cout, th, two_w)   # kh = 1
    up = jnp.stack([row0, row1], axis=-2).reshape(cout, two_th, two_w)

    o_ref[0, :ccorr] = corr_ref[0].astype(o_ref.dtype)
    o_ref[0, ccorr:] = up.astype(o_ref.dtype)


def _deconv_matmul_kernel(x_ref, w_ref, b_ref, o_ref):
    """Fallback: matmul + bias + relu only; pixel shuffle / concat done in XLA."""
    y = jnp.dot(w_ref[...], x_ref[0], preferred_element_type=jnp.float32)
    o_ref[0] = jnp.maximum(y + b_ref[...], 0.0).astype(o_ref.dtype)


# ---------------------------------------------------------------------------
# pallas_call wrappers
# ---------------------------------------------------------------------------

def _fused_forward(x_nchw, corr_nchw, w_big, b_big, *, th, out_dtype):
    n, cin, h, w = x_nchw.shape
    ccorr = corr_nchw.shape[1]
    c4 = w_big.shape[0]
    cout = c4 // 4
    hw = h * w
    t = th * w
    out_dtype = jnp.dtype(out_dtype)
    in_b = jnp.dtype(x_nchw.dtype).itemsize
    corr_b = jnp.dtype(corr_nchw.dtype).itemsize

    x_flat = x_nchw.reshape(n, cin, hw)               # contiguous -> free reshape

    cost = pl.CostEstimate(
        flops=2 * n * hw * cin * c4,
        transcendentals=0,
        bytes_accessed=(n * cin * hw * in_b + c4 * cin * in_b + 4 * c4
                        + n * ccorr * 4 * hw * corr_b
                        + n * (ccorr + cout) * 4 * hw * out_dtype.itemsize),
    )

    return pl.pallas_call(
        _fused_deconv_kernel,
        out_shape=jax.ShapeDtypeStruct((n, ccorr + cout, 2 * h, 2 * w), out_dtype),
        grid=(n, h // th),
        in_specs=[
            pl.BlockSpec((1, cin, t), lambda i, j: (i, 0, j)),              # activations
            pl.BlockSpec((c4, cin), lambda i, j: (0, 0)),                   # weight (resident)
            pl.BlockSpec((c4, 1), lambda i, j: (0, 0)),                     # bias (resident)
            pl.BlockSpec((1, ccorr, 2 * th, 2 * w), lambda i, j: (i, 0, j, 0)),  # skip
        ],
        out_specs=pl.BlockSpec((1, ccorr + cout, 2 * th, 2 * w),
                               lambda i, j: (i, 0, j, 0)),
        compiler_params=pltpu.CompilerParams(
            dimension_semantics=("parallel", "parallel"),
            vmem_limit_bytes=_vmem_limit_bytes()),
        cost_estimate=cost,
    )(x_flat, w_big, b_big, corr_nchw)


def _unfused_forward(x_nchw, corr_nchw, w_big, b_big, *, t, out_dtype):
    n, cin, h, w = x_nchw.shape
    c4 = w_big.shape[0]
    cout = c4 // 4
    hw = h * w
    out_dtype = jnp.dtype(out_dtype)
    in_b = jnp.dtype(x_nchw.dtype).itemsize

    x_flat = x_nchw.reshape(n, cin, hw)

    cost = pl.CostEstimate(
        flops=2 * n * hw * cin * c4,
        transcendentals=0,
        bytes_accessed=(n * cin * hw * in_b + c4 * cin * in_b + 4 * c4
                        + n * c4 * hw * out_dtype.itemsize),
    )

    out_flat = pl.pallas_call(
        _deconv_matmul_kernel,
        out_shape=jax.ShapeDtypeStruct((n, c4, hw), out_dtype),
        grid=(n, hw // t),
        in_specs=[
            pl.BlockSpec((1, cin, t), lambda i, j: (i, 0, j)),
            pl.BlockSpec((c4, cin), lambda i, j: (0, 0)),
            pl.BlockSpec((c4, 1), lambda i, j: (0, 0)),
        ],
        out_specs=pl.BlockSpec((1, c4, t), lambda i, j: (i, 0, j)),
        compiler_params=pltpu.CompilerParams(
            dimension_semantics=("parallel", "parallel"),
            vmem_limit_bytes=_vmem_limit_bytes()),
        cost_estimate=cost,
    )(x_flat, w_big, b_big)

    # (N, (kh,kw,Cout), H*W) -> NCHW pixel shuffle + concat in XLA (extra HBM
    # round trips; only used when the fused kernel does not lower).
    up = out_flat.reshape(n, 2, 2, cout, h, w)
    up = jnp.transpose(up, (0, 3, 4, 1, 5, 2)).reshape(n, cout, 2 * h, 2 * w)
    return jnp.concatenate([corr_nchw.astype(out_dtype), up], axis=1)


@functools.lru_cache(maxsize=None)
def _fused_variant_compiles(x_shape, corr_shape, w_shape, in_dtype, corr_dtype,
                            out_dtype, th):
    """True iff the fused (in-kernel pixel shuffle + concat) variant lowers and
    compiles for these shapes on the current backend."""
    try:
        fn = functools.partial(_fused_forward, th=th, out_dtype=jnp.dtype(out_dtype))
        jax.jit(fn).lower(
            jax.ShapeDtypeStruct(x_shape, jnp.dtype(in_dtype)),
            jax.ShapeDtypeStruct(corr_shape, jnp.dtype(corr_dtype)),
            jax.ShapeDtypeStruct(w_shape, jnp.dtype(in_dtype)),
            jax.ShapeDtypeStruct((w_shape[0], 1), jnp.float32),
        ).compile()
        return True
    except Exception:
        return False


# ---------------------------------------------------------------------------
# Public entry point
# ---------------------------------------------------------------------------

def upsampling_forward(x_nchw, corr_nchw, weight, bias, *,
                       compute_dtype=jnp.float32, out_dtype=jnp.float32):
    """Forward pass of pix2pix `Upsampling` (dropout disabled).

    x_nchw:    (N, Cin, H, W)
    corr_nchw: (N, Ccorr, 2H, 2W)   skip connection ("corresponding_layer")
    weight:    (Cin, Cout, 2, 2)    PyTorch ConvTranspose2d weight layout
    bias:      (Cout,)
    returns:   (N, Ccorr + Cout, 2H, 2W)

    compute_dtype=jnp.bfloat16 is recommended on v6e/v7x (bf16 MXU rate, half the
    activation HBM reads; accumulation stays f32).  out_dtype=jnp.bfloat16 halves
    the dominant output write when the consumer tolerates it.  f32 defaults keep
    bit-tight parity with the PyTorch module.
    """
    n, cin, h, w = x_nchw.shape
    cout = weight.shape[1]
    ccorr = corr_nchw.shape[1]
    c4 = 4 * cout
    compute_dtype = jnp.dtype(compute_dtype)
    out_dtype = jnp.dtype(out_dtype)

    # (Cin, Cout, kh, kw) -> rows ordered (kh, kw, Cout):  W_big[(kh,kw,c), i]
    w_big = jnp.transpose(weight, (2, 3, 1, 0)).reshape(c4, cin).astype(compute_dtype)
    b_big = jnp.tile(bias.astype(jnp.float32), (4,)).reshape(c4, 1)
    x_c = x_nchw.astype(compute_dtype)

    th = _choose_row_tile(n, h, w, cin, cout, ccorr,
                          compute_dtype.itemsize,
                          jnp.dtype(corr_nchw.dtype).itemsize,
                          out_dtype.itemsize)

    if _fused_variant_compiles((n, cin, h, w), tuple(corr_nchw.shape), (c4, cin),
                               compute_dtype.name, jnp.dtype(corr_nchw.dtype).name,
                               out_dtype.name, th):
        return _fused_forward(x_c, corr_nchw, w_big, b_big, th=th, out_dtype=out_dtype)

    # Fallback path (matmul-only kernel + XLA shuffle/concat).
    # TODO(synk): add an output-channel grid axis for very large C4 so the flat
    # tile never collapses below ~512 lanes on deep layers.
    t = _choose_flat_tile(h * w, cin, c4, compute_dtype.itemsize, out_dtype.itemsize)
    return _unfused_forward(x_c, corr_nchw, w_big, b_big, t=t, out_dtype=out_dtype)

    # TODO(synk): Dropout2d(0.5) branch (dropout=True) not implemented; module
    # default is dropout=False.


# ---------------------------------------------------------------------------
# Reference + self-test
# ---------------------------------------------------------------------------

def _reference_forward(x_nchw, corr_nchw, weight, bias):
    n, cin, h, w = x_nchw.shape
    cout = weight.shape[1]
    y = jnp.einsum('nihw,iopq->nohpwq', x_nchw, weight)
    y = y.reshape(n, cout, 2 * h, 2 * w) + bias[None, :, None, None]
    y = jnp.maximum(y, 0.0)
    return jnp.concatenate([corr_nchw, y], axis=1)


if __name__ == "__main__":
    key = jax.random.PRNGKey(0)
    k_x, k_c, k_w, k_b = jax.random.split(key, 4)

    N, Cin, Cout, H, W = 2, 4, 4, 16, 16

    x = jax.random.normal(k_x, (N, Cin, H, W), dtype=jnp.float32)
    corr = jax.random.normal(k_c, (N, Cout, 2 * H, 2 * W), dtype=jnp.float32)
    # ConvTranspose2d parameter shapes: (Cin, Cout, 2, 2), (Cout,)
    weight = 0.1 * jax.random.normal(k_w, (Cin, Cout, 2, 2), dtype=jnp.float32)
    bias = 0.1 * jax.random.normal(k_b, (Cout,), dtype=jnp.float32)

    ref = _reference_forward(x, corr, weight, bias)

    # f32 path, eager (the lowering probe runs here, outside any trace).
    out = jax.block_until_ready(upsampling_forward(x, corr, weight, bias))
    assert out.shape == (N, 2 * Cout, 2 * H, 2 * W), out.shape
    assert jnp.allclose(out, ref, atol=1e-5, rtol=1e-5)

    # Same path under jit (probe result is cached; no nested compile).
    out_jit = jax.block_until_ready(jax.jit(upsampling_forward)(x, corr, weight, bias))
    assert jnp.allclose(out_jit, ref, atol=1e-5, rtol=1e-5)

    # bf16-input path (recommended default on v6e/v7x); f32 accumulation, loose tol.
    out_bf16 = jax.block_until_ready(
        upsampling_forward(x, corr, weight, bias, compute_dtype=jnp.bfloat16))
    assert jnp.allclose(out_bf16, ref, atol=6e-2, rtol=3e-2)

    print("KERNEL_OK")
</pallas_src>

<mosaic_0001>
module attributes {stable_mosaic.version = 11 : i64} {
  func.func @_deconv_matmul_kernel(%arg0: i32, %arg1: i32, %arg2: memref<1x4x256xf32, #tpu.memory_space<vmem>>, %arg3: memref<16x4xf32, #tpu.memory_space<vmem>>, %arg4: memref<16x1xf32, #tpu.memory_space<vmem>>, %arg5: memref<1x16x256xf32, #tpu.memory_space<vmem>>) attributes {dimension_semantics = [#tpu.dimension_semantics<parallel>, #tpu.dimension_semantics<parallel>], iteration_bounds = array<i64: 2, 1>, scalar_prefetch = 0 : i64, scratch_operands = 0 : i64, tpu.core_type = #tpu.core_type<tc>, window_params = [{transform_indices = @transform_0, window_bounds = array<i64: 1, 4, 256>}, {pipeline_mode = #tpu.pipeline_mode<synchronous>, transform_indices = @transform_1, window_bounds = array<i64: 16, 4>}, {pipeline_mode = #tpu.pipeline_mode<synchronous>, transform_indices = @transform_2, window_bounds = array<i64: 16, 1>}, {transform_indices = @transform_3, window_bounds = array<i64: 1, 16, 256>}]} {
    %c0 = arith.constant 0 : index
    %c0_0 = arith.constant 0 : index
    %0 = vector.load %arg3[%c0, %c0_0] : memref<16x4xf32, #tpu.memory_space<vmem>>, vector<16x4xf32>
    %c0_1 = arith.constant 0 : index
    %c0_2 = arith.constant 0 : index
    %c0_3 = arith.constant 0 : index
    %1 = vector.load %arg2[%c0_1, %c0_2, %c0_3] : memref<1x4x256xf32, #tpu.memory_space<vmem>>, vector<1x4x256xf32>
    %2 = vector.shape_cast %1 : vector<1x4x256xf32> to vector<4x256xf32>
    %cst = arith.constant dense<0.000000e+00> : vector<16x256xf32>
    %3 = tpu.matmul %0, %2, %cst {dimension_numbers = #tpu.dot_dimension_numbers<[1], [0], [0], [1], [0, 0, 1, 1], [], []>} : vector<16x4xf32>, vector<4x256xf32>, vector<16x256xf32> -> vector<16x256xf32>
    %c0_4 = arith.constant 0 : index
    %c0_5 = arith.constant 0 : index
    %4 = vector.load %arg4[%c0_4, %c0_5] : memref<16x1xf32, #tpu.memory_space<vmem>>, vector<16x1xf32>
    %5 = vector.broadcast %4 : vector<16x1xf32> to vector<16x256xf32>
    %6 = arith.addf %3, %5 : vector<16x256xf32>
    %cst_6 = arith.constant 0.000000e+00 : f32
    %7 = vector.broadcast %cst_6 : f32 to vector<16x256xf32>
    %8 = arith.maximumf %6, %7 : vector<16x256xf32>
    %c0_7 = arith.constant 0 : index
    %c0_8 = arith.constant 0 : index
    %c0_9 = arith.constant 0 : index
    %9 = vector.load %arg5[%c0_7, %c0_8, %c0_9] : memref<1x16x256xf32, #tpu.memory_space<vmem>>, vector<1x16x256xf32>
    %10 = vector.shape_cast %9 : vector<1x16x256xf32> to vector<16x256xf32>
    %11 = vector.shape_cast %8 : vector<16x256xf32> to vector<1x16x256xf32>
    tpu.vector_store %arg5[%c0_7, %c0_8, %c0_9], %11 {strides = array<i32>} : memref<1x16x256xf32, #tpu.memory_space<vmem>>, vector<1x16x256xf32>,
    return
  }
  func.func @transform_0(%arg0: i32, %arg1: i32) -> (i32, i32, i32) {
    %c0_i32 = arith.constant 0 : i32
    %c0_i32_0 = arith.constant 0 : i32
    return %arg0, %c0_i32, %arg1 : i32, i32, i32
  }
  func.func @transform_1(%arg0: i32, %arg1: i32) -> (i32, i32) {
    %c0_i32 = arith.constant 0 : i32
    %c0_i32_0 = arith.constant 0 : i32
    %c0_i32_1 = arith.constant 0 : i32
    return %c0_i32, %c0_i32_0 : i32, i32
  }
  func.func @transform_2(%arg0: i32, %arg1: i32) -> (i32, i32) {
    %c0_i32 = arith.constant 0 : i32
    %c0_i32_0 = arith.constant 0 : i32
    %c0_i32_1 = arith.constant 0 : i32
    return %c0_i32, %c0_i32_0 : i32, i32
  }
  func.func @transform_3(%arg0: i32, %arg1: i32) -> (i32, i32, i32) {
    %c0_i32 = arith.constant 0 : i32
    %c0_i32_0 = arith.constant 0 : i32
    return %arg0, %c0_i32, %arg1 : i32, i32, i32
  }
}

</mosaic_0001>

<llo_original>
// kernel: tpu_custom_call.1
$region0: #{tpu_custom_call.1}
  #allocation0 [shape = 'u32[]', space=smem, size = 0x4, offset = 0x4, fixed_abs, tag = 'smem constant byte address 0x4 - core index']
  #allocation1 [shape = 'u32[144,128]{1,0:T(1,128)}', space=vmem, size = 0x12000, scoped, tag = 'internal scratch']
  %s0 = inlined_call_operand.vmem [shape: f32[2,4,256], index: 0, kind: input, shape index: {}]
  %s1 = inlined_call_operand.vmem [shape: f32[16,4], index: 1, kind: input, shape index: {}]
  %s2 = inlined_call_operand.vmem [shape: f32[16,1], index: 2, kind: input, shape index: {}]
  %s3 = inlined_call_operand.hbm [shape: f32[2,16,256], index: 3, kind: output, shape index: {}]
  %s4 = sld [smem:[#allocation0]]
  $region45: #{tpu_custom_call.1} parent=0
    _
  %s6 = ssub.s32 1, %s4
  %s7 = scalar_select 0, %s6, %s4
  $region1: #{tpu_custom_call.1} parent=0
    #allocation2 [shape = 'u8[32768]{0}', space=vmem, size = 0x8000, scoped, tag = 'output window, operand 0']
    #allocation3 [shape = 's32[2]{0}', space=sflag, size = 0x8, scoped, tag = 'scoped memory for tpu_custom_call.1']
    %8 = vsyncpa [#allocation3], 0
    %s9 = scalar_lea.sflag [#allocation3], 1
    %10 = vsyncpa %s9, 0
    loop: start=0, step=1, limit=4
    $region2: #{tpu_custom_call.1} parent=1 // loop_pre_header
      _
    $region3: #{tpu_custom_call.1} parent=1 // loop_header
      %s12 = sphi 0, %s16
      %p13 = scmp.ge.s32.totalorder %s12, 4
      %s19 = sphi 0, %s31
      %s20 = sphi 0, %s27
      %s21 = sphi 0, %s19
      %s22 = sphi 0, %s20
      %s23 = sphi 0, %s21
      %s24 = sphi 0, %s22
      %s36 = sphi 0, %s38
      %s39 = sphi 0, %s36
      %s40 = sphi 0, %s39
      %s56 = sphi 0, %s40
      %s60 = sphi 0, %s60
      %s62 = sphi 0, %s60
      %s63 = sphi 0, %s62
      %s77 = sphi 0, %s63
      %s81 = sphi 0, %s81
      %s83 = sphi 0, %s81
      %s84 = sphi 0, %s83
      %s98 = sphi 0, %s84
      %s106 = sphi 0, %s108
      %s109 = sphi 0, %s106
      %s110 = sphi 0, %s109
      %s126 = sphi 0, %s110
    $region4: #{tpu_custom_call.1} parent=1 // loop_header_branch
      %15 = sbr.rel (%p13) target = $region8
    $region5: #{tpu_custom_call.1} parent=1 // loop_body
      %s17 = ssub.s32 %s12, 1
      %s18 = ssub.s32 %s12, 2
      %s25 = sadd.s32 1, %s20
      %p26 = scmp.ge.s32.totalorder %s25, 1
      %s27 = scalar_select %p26, 0, %s25
      %s28 = sadd.s32 1, %s19
      %s29 = scalar_select %p26, %s28, %s19
      %p30 = scmp.ge.s32.totalorder %s29, 2
      %s31 = scalar_select %p30, 0, %s29
      %s32 = ssub.s32 %s19, %s31
      %s33 = ssub.s32 %s20, %s27
      %s34 = sor.u32 %s32, %s33
      %p35 = scmp.eq.s32.totalorder %s34, 0
      %s37 = sadd.s32 %s36, 1
      %s38 = scalar_select %p35, %s36, %s37
      %p41 = pneg %p35
      %p42 = scmp.eq.s32.totalorder %s12, 1
      %p43 = por %p41, %p42
      %p44 = scmp.ne.s32.totalorder %s36, %s39
      %p45 = scmp.eq.s32.totalorder %s12, 0
      %p46 = por %p44, %p45
      %p47 = scmp.ne.s32.totalorder %s36, %s39
      %p48 = scmp.eq.s32.totalorder %s17, 1
      %p49 = por %p47, %p48
      %p50 = scmp.ne.s32.totalorder %s39, %s40
      %p51 = scmp.eq.s32.totalorder %s17, 0
      %p52 = por %p50, %p51
      %p53 = scmp.ne.s32.totalorder %s39, %s40
      %p54 = scmp.eq.s32.totalorder %s18, 1
      %p55 = por %p53, %p54
      %p57 = scmp.ne.s32.totalorder %s40, %s56
      %p58 = scmp.eq.s32.totalorder %s18, 0
      %p59 = por %p57, %p58
      %s61 = sadd.s32 %s60, 1
      %p64 = scmp.eq.s32.totalorder %s12, 1
      %p65 = scmp.ne.s32.totalorder %s60, %s62
      %p66 = scmp.eq.s32.totalorder %s12, 0
      %p67 = por %p65, %p66
      %p68 = scmp.ne.s32.totalorder %s60, %s62
      %p69 = scmp.eq.s32.totalorder %s17, 1
      %p70 = por %p68, %p69
      %p71 = scmp.ne.s32.totalorder %s62, %s63
      %p72 = scmp.eq.s32.totalorder %s17, 0
      %p73 = por %p71, %p72
      %p74 = scmp.ne.s32.totalorder %s62, %s63
      %p75 = scmp.eq.s32.totalorder %s18, 1
      %p76 = por %p74, %p75
      %p78 = scmp.ne.s32.totalorder %s63, %s77
      %p79 = scmp.eq.s32.totalorder %s18, 0
      %p80 = por %p78, %p79
      %s82 = sadd.s32 %s81, 1
      %p85 = scmp.eq.s32.totalorder %s12, 1
      %p86 = scmp.ne.s32.totalorder %s81, %s83
      %p87 = scmp.eq.s32.totalorder %s12, 0
      %p88 = por %p86, %p87
      %p89 = scmp.ne.s32.totalorder %s81, %s83
      %p90 = scmp.eq.s32.totalorder %s17, 1
      %p91 = por %p89, %p90
      %p92 = scmp.ne.s32.totalorder %s83, %s84
      %p93 = scmp.eq.s32.totalorder %s17, 0
      %p94 = por %p92, %p93
      %p95 = scmp.ne.s32.totalorder %s83, %s84
      %p96 = scmp.eq.s32.totalorder %s18, 1
      %p97 = por %p95, %p96
      %p99 = scmp.ne.s32.totalorder %s84, %s98
      %p100 = scmp.eq.s32.totalorder %s18, 0
      %p101 = por %p99, %p100
      %s102 = ssub.s32 %s19, %s31
      %s103 = ssub.s32 %s20, %s27
      %s104 = sor.u32 %s102, %s103
      %p105 = scmp.eq.s32.totalorder %s104, 0
      %s107 = sadd.s32 %s106, 1
      %s108 = scalar_select %p105, %s106, %s107
      %p111 = pneg %p105
      %p112 = scmp.eq.s32.totalorder %s12, 1
      %p113 = por %p111, %p112
      %p114 = scmp.ne.s32.totalorder %s106, %s109
      %p115 = scmp.eq.s32.totalorder %s12, 0
      %p116 = por %p114, %p115
      %p117 = scmp.ne.s32.totalorder %s106, %s109
      %p118 = scmp.eq.s32.totalorder %s17, 1
      %p119 = por %p117, %p118
      %p120 = scmp.ne.s32.totalorder %s109, %s110
      %p121 = scmp.eq.s32.totalorder %s17, 0
      %p122 = por %p120, %p121
      %p123 = scmp.ne.s32.totalorder %s109, %s110
      %p124 = scmp.eq.s32.totalorder %s18, 1
      %p125 = por %p123, %p124
      %p127 = scmp.ne.s32.totalorder %s110, %s126
      %p128 = scmp.eq.s32.totalorder %s18, 0
      %p129 = por %p127, %p128
      %p130 = scmp.le.s32.totalorder 1, %s12
      %p131 = scmp.lt.s32.totalorder %s12, 3
      %p132 = pnand %p130, %p131
      %p133 = pneg %p132
      // Predicated region
      $region9: #{tpu_custom_call.1} parent=5 // pred_check
        _
      $region10: #{tpu_custom_call.1} parent=5 // pred_check_branch
        %135 = sbr.rel (%p132) target = $region12
      $region11: #{tpu_custom_call.1} parent=5 // pred_region
        %s136 = ssub.s32 %s12, 1
        // Predicated region
        $region13: #{tpu_custom_call.1} parent=11 // pred_check
          %p137 = pneg %p73
        $region14: #{tpu_custom_call.1} parent=11 // pred_check_branch
          %139 = sbr.rel (%p137) target = $region16
        $region15: #{tpu_custom_call.1} parent=11 // pred_region
          _
        $region16: #{tpu_custom_call.1} parent=11 // pred_fallthru
          _
        // Predicated region
        $region17: #{tpu_custom_call.1} parent=11 // pred_check
          %p140 = pneg %p94
        $region18: #{tpu_custom_call.1} parent=11 // pred_check_branch
          %142 = sbr.rel (%p140) target = $region20
        $region19: #{tpu_custom_call.1} parent=11 // pred_region
          _
        $region20: #{tpu_custom_call.1} parent=11 // pred_fallthru
          _
      $region12: #{tpu_custom_call.1} parent=5 // pred_fallthru
        _
      %p143 = scmp.lt.s32.totalorder %s12, 2
      // Predicated region
      $region21: #{tpu_custom_call.1} parent=5 // pred_check
        %p144 = pneg %p143
      $region22: #{tpu_custom_call.1} parent=5 // pred_check_branch
        %146 = sbr.rel (%p144) target = $region24
      $region23: #{tpu_custom_call.1} parent=5 // pred_region
        // Predicated region
        $region25: #{tpu_custom_call.1} parent=23 // pred_check
          %p147 = pneg %p46
        $region26: #{tpu_custom_call.1} parent=23 // pred_check_branch
          %149 = sbr.rel (%p147) target = $region28
        $region27: #{tpu_custom_call.1} parent=23 // pred_region
          %s150 = smul.u32 2, %s20
          %p151 = scmp.lt.s32.totalorder %s19, 1
          %s152 = scalar_select %p151, %s19, 1
          %p153 = scmp.lt.s32.totalorder %s150, 1
          %s154 = scalar_select %p153, %s150, 1
          %s155 = smul.addr %s152, 2
          %s156 = sadd.s32 %s154, %s155
          %s157 = smul.addr %s156, 4
          %s158 = scalar_lea.vmem %s0, %s157
          %s159 = smul.u32 2, %s20
        $region28: #{tpu_custom_call.1} parent=23 // pred_fallthru
          _
      $region24: #{tpu_custom_call.1} parent=5 // pred_fallthru
        _
      %p160 = scmp.le.s32.totalorder 1, %s12
      %p161 = scmp.lt.s32.totalorder %s12, 3
      %p162 = pnand %p160, %p161
      %p163 = pneg %p162
      // Predicated region
      $region29: #{tpu_custom_call.1} parent=5 // pred_check
        _
      $region30: #{tpu_custom_call.1} parent=5 // pred_check_branch
        %165 = sbr.rel (%p162) target = $region32
      $region31: #{tpu_custom_call.1} parent=5 // pred_region
        %s166 = ssub.s32 %s12, 1
        %s167 = smul.u32 2, %s22
        %p168 = scmp.lt.s32.totalorder %s21, 1
        %s169 = scalar_select %p168, %s21, 1
        %p170 = scmp.lt.s32.totalorder %s167, 1
        %s171 = scalar_select %p170, %s167, 1
        %s172 = smul.addr %s169, 2
        %s173 = sadd.s32 %s171, %s172
        %s174 = smul.addr %s173, 4
        %s175 = scalar_lea.vmem %s0, %s174
        %p176 = pneg %p52
        %p177 = pneg %p49
        %p178 = pneg %p73
        %p179 = pneg %p70
        %p180 = pneg %p94
        %p181 = pneg %p91
        %p182 = pneg %p122
        %p183 = pneg %p119
        %s184 = sand.u32 %s109, 1
        %s185 = scalar_lea.sflag [#allocation3], %s184
        %s186 = sand.u32 %s109, 1
        %s187 = smul.addr %s186, 32
        %s188 = scalar_lea.vmem [#allocation2], %s187
        %s189 = smul.u32 2, %s22
        %p190 = scmp.lt.s32.totalorder %s21, 1
        %s191 = scalar_select %p190, %s21, 1
        %p192 = scmp.lt.s32.totalorder %s189, 1
        %s193 = scalar_select %p192, %s189, 1
        %s194 = smul.addr %s191, 2
        %s195 = sadd.s32 %s193, %s194
        %s196 = smul.addr %s195, 4
        %s197 = scalar_lea.vmem %s0, %s196
        %s198 = smul.u32 2, %s22
        %s199 = smul.u32 2, %s22
        %v200 = vld [vmem:[%s1] sm:$0xff]
        %v201 = vld [vmem:[%s1 + $0x8] sm:$0xff]
        %v202 = vld [vmem:[%s197] sm:$0xff]
        %v203 = vld [vmem:[%s2] sm:$0xff]
        %v204 = vld [vmem:[%s2 + $0x8] sm:$0xff]
        %206 = vset.pattern.permute.xlu0 0
        %207 = vperm.xlu0 %206, %v203
        %v208 = vpop.permute.xlu0 %207
        %211 = vset.pattern.permute.xlu0 0
        %212 = vperm.xlu0 %211, %v204
        %v213 = vpop.permute.xlu0 %212
        %v216 = vcombine.high %v202, %v202
        %vm217 = vcmask 31744
        %v219 = vsel %vm217, %v200, 0
        %v222 = vsel %vm217, %v201, 0
        %vm224 = vcmask 1043456
        %v225 = vsel %vm224, %v202, 0
        %v227 = vsel %vm224, %v216, 0
        %229 = vmatprep.subr.mxu0 0.0
        %230 = vmatpush1.msra.mxu0 0.0
        %231 = vmatprep.subr.mxu0 0.0
        %232 = vmatpush1.msra.mxu0 0.0
        %233 = vmatprep.subr.mxu0 0.0
        %234 = vmatpush1.msra.mxu0 0.0
        %235 = vmatprep.subr.mxu0 0.0
        %236 = vmatpush1.msra.mxu0 0.0
        %237 = vmatprep.subr.mxu0 0.0
        %238 = vmatpush1.msra.mxu0 0.0
        %239 = vmatprep.subr.mxu0 0.0
        %240 = vmatpush1.msra.mxu0 0.0
        %241 = vmatprep.subr.mxu0 0.0
        %242 = vmatpush1.msra.mxu0 0.0
        %243 = vmatprep.subr.mxu0 0.0
        %244 = vmatpush1.msra.mxu0 0.0
        %245 = vmatprep.subr.mxu0 0.0
        %246 = vmatpush1.msra.mxu0 0.0
        %247 = vmatprep.subr.mxu0 0.0
        %248 = vmatpush1.msra.mxu0 0.0
        %249 = vmatprep.subr.mxu0 0.0
        %250 = vmatpush1.msra.mxu0 0.0
        %251 = vmatprep.subr.mxu0 0.0
        %252 = vmatpush1.msra.mxu0 0.0
        %253 = vmatprep.subr.mxu0 0.0
        %254 = vmatpush1.msra.mxu0 0.0
        %255 = vmatprep.subr.mxu0 0.0
        %256 = vmatpush1.msra.mxu0 0.0
        %257 = vmatprep.subr.mxu0 0.0
        %258 = vmatpush1.msra.mxu0 0.0
        %259 = vmatprep.subr.mxu0 %v227
        %260 = vmatpush1.msra.mxu0 %v225
        %261 = vmatprep.subr.mxu0 0.0
        %262 = vmatpush2.msra.mxu0 0.0
        %263 = vmatprep.subr.mxu0 0.0
        %264 = vmatpush2.msra.mxu0 0.0
        %265 = vmatprep.subr.mxu0 0.0
        %266 = vmatpush2.msra.mxu0 0.0
        %267 = vmatprep.subr.mxu0 0.0
        %268 = vmatpush2.msra.mxu0 0.0
        %269 = vmatprep.subr.mxu0 0.0
        %270 = vmatpush2.msra.mxu0 0.0
        %271 = vmatprep.subr.mxu0 0.0
        %272 = vmatpush2.msra.mxu0 0.0
        %273 = vmatprep.subr.mxu0 0.0
        %274 = vmatpush2.msra.mxu0 0.0
        %275 = vmatprep.subr.mxu0 0.0
        %276 = vmatpush2.msra.mxu0 0.0
        %277 = vmatprep.subr.mxu0 0.0
        %278 = vmatpush2.msra.mxu0 0.0
        %279 = vmatprep.subr.mxu0 0.0
        %280 = vmatpush2.msra.mxu0 0.0
        %281 = vmatprep.subr.mxu0 0.0
        %282 = vmatpush2.msra.mxu0 0.0
        %283 = vmatprep.subr.mxu0 0.0
        %284 = vmatpush2.msra.mxu0 0.0
        %285 = vmatprep.subr.mxu0 0.0
        %286 = vmatpush2.msra.mxu0 0.0
        %287 = vmatprep.subr.mxu0 0.0
        %288 = vmatpush2.msra.mxu0 0.0
        %289 = vmatprep.subr.mxu0 0.0
        %290 = vmatpush2.msra.mxu0 0.0
        %291 = vmatprep.subr.mxu0 0.0
        %292 = vmatpush2.msra.mxu0 0.0
        %293 = vmatprep.mubr.f32.mxu0 0.0
        %294 = vmatmul.mubr.f32.gmra.mxu0 %v219
        %v295 = vpop.f32.mrf.mxu0
        %v296 = vadd.f32 %v208, %v295
        %v297 = vpop.f32.mrf.mxu0
        %v298 = vadd.f32 %v208, %v297
        %299 = vmatprep.mubr.f32.mxu0 0.0
        %300 = vmatmul.mubr.f32.gmra.mxu0 %v222
        %v301 = vpop.f32.mrf.mxu0
        %v302 = vadd.f32 %v213, %v301
        %v303 = vpop.f32.mrf.mxu0
        %v304 = vadd.f32 %v213, %v303
        %305 = vdwg.mxu0
        %v306 = vmax.f32 %v296, 0.0
        %v307 = vmax.f32 %v298, 0.0
        %v308 = vmax.f32 %v302, 0.0
        %v309 = vmax.f32 %v304, 0.0
        %310 = vst [vmem:[%s188] sm:$0xff] %v306
        %311 = vst [vmem:[%s188 + $0x8] sm:$0xff] %v307
        %312 = vst [vmem:[%s188 + $0x10] sm:$0xff] %v308
        %313 = vst [vmem:[%s188 + $0x18] sm:$0xff] %v309
        %s314 = sand.u32 %s109, 1
        %s315 = scalar_lea.sflag [#allocation3], %s314
        %s316 = sand.u32 %s109, 1
        %s317 = smul.addr %s316, 32
        %s318 = scalar_lea.vmem [#allocation2], %s317
        // Predicated region
        $region33: #{tpu_custom_call.1} parent=31 // pred_check
          %p319 = pneg %p119
        $region34: #{tpu_custom_call.1} parent=31 // pred_check_branch
          %321 = sbr.rel (%p319) target = $region36
        $region35: #{tpu_custom_call.1} parent=31 // pred_region
          %s322 = smul.u32 2, %s22
          %s324 = ssub.s32 512, 512
          %325 = vsyncadd %s315, %s324
          %s326 = smul.addr %s21, 4
          %s327 = sadd.s32 %s322, %s326
          %s328 = smul.addr %s327, 128
          %s329 = scalar_lea.hbm %s3, %s328
          %s330 = sshll.u32 %s318, 4
          %s331 = int_to_ptr.vmem [resolvable:$true] %s330
          %336 = dma.vmem_to_hbm [thread:$0]  %s331, 512, %s329, %s315, 256, 256, 16
        $region36: #{tpu_custom_call.1} parent=31 // pred_fallthru
          _
      $region32: #{tpu_custom_call.1} parent=5 // pred_fallthru
        _
      %p337 = scmp.le.s32.totalorder 2, %s12
      // Predicated region
      $region37: #{tpu_custom_call.1} parent=5 // pred_check
        %p338 = pneg %p337
      $region38: #{tpu_custom_call.1} parent=5 // pred_check_branch
        %340 = sbr.rel (%p338) target = $region40
      $region39: #{tpu_custom_call.1} parent=5 // pred_region
        %s341 = ssub.s32 %s12, 2
        // Predicated region
        $region41: #{tpu_custom_call.1} parent=39 // pred_check
          %p342 = pneg %p125
        $region42: #{tpu_custom_call.1} parent=39 // pred_check_branch
          %344 = sbr.rel (%p342) target = $region44
        $region43: #{tpu_custom_call.1} parent=39 // pred_region
          %s345 = sand.u32 %s110, 1
          %s346 = scalar_lea.sflag [#allocation3], %s345
          %s347 = sand.u32 %s110, 1
          %s348 = smul.addr %s347, 32
          %s349 = scalar_lea.vmem [#allocation2], %s348
          %350 = dma.done %s346, 512
        $region44: #{tpu_custom_call.1} parent=39 // pred_fallthru
          _
      $region40: #{tpu_custom_call.1} parent=5 // pred_fallthru
        _
    $region6: #{tpu_custom_call.1} parent=1 // loop_footer
      %s16 = sadd.s32 1, %s12
    $region7: #{tpu_custom_call.1} parent=1 // loop_footer_branch
      %11 = sbr.rel target = $region3
    $region8: #{tpu_custom_call.1} parent=1 // loop_exit
      _
    %351 = vsyncpa [#allocation3], 1
    %s352 = scalar_lea.sflag [#allocation3], 1
    %353 = vsyncpa %s352, 1

</llo_original>
